<compile_context>
chip_gen: v7x
topology: tpu7x:2x2x1
jax: 0.10.0
libtpu: 0.0.40
codegen_flags: <defaults>
</compile_context>

<pallas_src>
import functools

import jax
import jax.numpy as jnp
from jax.experimental import pallas as pl
from jax.experimental.pallas import tpu as pltpu


def _contrastive_kernel(f1_ref, f2_ref, o1_ref, o2_ref, side_ref, out_ref,
                        *, margin, batch, tile, steps):
    c = pl.program_id(0)          # core / parallel axis
    s = pl.program_id(1)          # batch-reduction axis ("arbitrary")

    @pl.when(s == 0)
    def _():
        out_ref[...] = jnp.zeros_like(out_ref)

    # Nominal block index (may point past the end of the data for the tail block;
    # the index_map clamps the DMA, the mask below zeroes the contribution).
    blk = c * steps + s
    row = jax.lax.broadcasted_iota(jnp.int32, (tile, 1), 0) + blk * tile
    valid = row < batch                                   # (TB, 1) bool
    validf = valid.astype(jnp.float32)

    # ---- side info: mask garbage rows BEFORE any use so NaN/inf never appears ----
    side = jnp.where(valid, side_ref[...].astype(jnp.float32), 0.0)   # (TB, 3)
    l1 = side[:, 0:1].astype(jnp.int32)     # exact for class ids < 2^24
    l2 = side[:, 1:2].astype(jnp.int32)
    sim = side[:, 2:3]

    # Class-index iota hoisted once and shared by both CE terms (int32 compare).
    cls = jax.lax.broadcasted_iota(jnp.int32, o1_ref.shape, 1)

    # ---- cross-entropy partial sums (mean taken in the wrapper) ----
    def ce_sum(logits_ref, labels_i):
        # Garbage rows are zeroed before max/exp -> lse stays finite; the
        # validf multiply then removes their (finite) contribution exactly.
        logits = jnp.where(valid, logits_ref[...], 0).astype(jnp.float32)  # (TB, C)
        m = jnp.max(logits, axis=-1, keepdims=True)
        lse = m + jnp.log(jnp.sum(jnp.exp(logits - m), axis=-1, keepdims=True))
        picked = jnp.sum(jnp.where(cls == labels_i, logits, 0.0),
                         axis=-1, keepdims=True)                           # (TB, 1)
        return jnp.sum((lse - picked) * validf)

    ce1 = ce_sum(o1_ref, l1)
    ce2 = ce_sum(o2_ref, l2)

    # ---- pairwise euclidean distance (torch F.pairwise_distance, eps=1e-6) ----
    diff = (f1_ref[...] - f2_ref[...]).astype(jnp.float32) + jnp.float32(1e-6)
    diff = jnp.where(valid, diff, 0.0)                    # garbage-safe before square
    d2 = jnp.sum(diff * diff, axis=-1, keepdims=True)     # (TB, 1)
    d = jnp.sqrt(d2)
    hinge = jnp.maximum(jnp.float32(margin) - d, 0.0)
    per_sample = (1.0 - sim) * d2 + sim * (hinge * hinge)  # uses d2 directly
    cont = jnp.sum(per_sample * validf)

    # ---- accumulate the three partial sums into this core's lane-dense block ----
    lane = jax.lax.broadcasted_iota(jnp.int32, out_ref.shape, 2)
    upd = (jnp.where(lane == 0, cont, 0.0)
           + jnp.where(lane == 1, ce1, 0.0)
           + jnp.where(lane == 2, ce2, 0.0))
    out_ref[...] += upd


def contrastive_loss(feature1, feature2, output1, output2,
                     label1, label2, sim_labels, *, margin=1.0, tile_b=1024):
    B, D = feature1.shape
    _, C = output1.shape

    # Pack labels + similarity into one (B, 3) f32 side array (exact for class ids).
    side = jnp.concatenate(
        [label1.reshape(B, 1).astype(jnp.float32),
         label2.reshape(B, 1).astype(jnp.float32),
         sim_labels.reshape(B, 1).astype(jnp.float32)], axis=1)

    f_bytes = feature1.dtype.itemsize
    o_bytes = output1.dtype.itemsize

    # ---- tile size from an explicit VMEM budget (no wrapper-side padding) ----
    VMEM_LIMIT = 48 * 1024 * 1024            # < v7x 64 MiB physical, > v5e 16 MiB default
    row_bytes = 2 * D * f_bytes + 2 * C * o_bytes + 3 * 4       # raw HBM bytes per row
    temp_bytes = (2 * D + 2 * C) * 4                            # f32 temps of live block
    budget = int(0.75 * VMEM_LIMIT)
    cap = max(8, budget // (2 * row_bytes + temp_bytes))        # 2x = double buffering
    tb = min(B, tile_b, cap)
    if B >= 8:
        tb = max(8, (tb // 8) * 8)
    else:
        tb = B                                                  # block == full batch dim

    G = pl.cdiv(B, tb)                       # number of batch blocks (last may be partial)
    NC = 2 if G >= 2 else 1                  # split across both TCs on v7x; harmless on 1-TC
    steps = pl.cdiv(G, NC)

    def in_map(c, s):
        # Clamp so a core's overhanging step re-reads the last real block; the
        # in-kernel row mask (nominal index >= B) zeroes its contribution.
        return (jnp.minimum(c * steps + s, G - 1), 0)

    cost = pl.CostEstimate(
        flops=int(B * (3 * D + 8 * C + 16)),
        transcendentals=int(B * (2 * C + 2)),
        bytes_accessed=int(B * row_bytes + NC * 8 * 128 * 4))

    out = pl.pallas_call(
        functools.partial(_contrastive_kernel, margin=margin, batch=B,
                          tile=tb, steps=steps),
        out_shape=jax.ShapeDtypeStruct((NC, 8, 128), jnp.float32),
        grid=(NC, steps),
        in_specs=[
            pl.BlockSpec((tb, D), in_map),   # feature1
            pl.BlockSpec((tb, D), in_map),   # feature2
            pl.BlockSpec((tb, C), in_map),   # output1
            pl.BlockSpec((tb, C), in_map),   # output2
            pl.BlockSpec((tb, 3), in_map),   # packed labels + sim
        ],
        out_specs=pl.BlockSpec((1, 8, 128), lambda c, s: (c, 0, 0)),
        compiler_params=pltpu.CompilerParams(
            dimension_semantics=("parallel", "arbitrary"),
            vmem_limit_bytes=VMEM_LIMIT),
        cost_estimate=cost,
    )(feature1, feature2, output1, output2, side)

    # Cross-core reduction + mean scaling done in the wrapper (trivial XLA work).
    sums = jnp.sum(out[:, 0, :], axis=0) * jnp.float32(1.0 / B)
    return sums[0], sums[1], sums[2]


def _reference(feature1, feature2, output1, output2, label1, label2, sim_labels,
               margin=1.0):
    """Pure-JAX reference mirroring the PyTorch module."""
    def ce(logits, labels):
        lse = jax.nn.logsumexp(logits, axis=-1)
        picked = jnp.take_along_axis(logits, labels[:, None], axis=-1)[:, 0]
        return jnp.mean(lse - picked)
    d = jnp.sqrt(jnp.sum((feature1 - feature2 + 1e-6) ** 2, axis=-1))
    cont = jnp.mean((1.0 - sim_labels) * d ** 2
                    + sim_labels * jnp.maximum(margin - d, 0.0) ** 2)
    return cont, ce(output1, label1), ce(output2, label2)


if __name__ == "__main__":
    key = jax.random.PRNGKey(0)
    # B=12 with tile 8 exercises the two-core split AND the garbage-tail masking path.
    B, D, C = 12, 32, 10
    ks = jax.random.split(key, 7)
    feature1 = jax.random.normal(ks[0], (B, D), dtype=jnp.float32)
    feature2 = jax.random.normal(ks[1], (B, D), dtype=jnp.float32)
    output1 = jax.random.normal(ks[2], (B, C), dtype=jnp.float32)
    output2 = jax.random.normal(ks[3], (B, C), dtype=jnp.float32)
    label1 = jax.random.randint(ks[4], (B,), 0, C, dtype=jnp.int32)
    label2 = jax.random.randint(ks[5], (B,), 0, C, dtype=jnp.int32)
    sim_labels = jax.random.bernoulli(ks[6], 0.5, (B,)).astype(jnp.float32)

    cont, ce1, ce2 = contrastive_loss(feature1, feature2, output1, output2,
                                      label1, label2, sim_labels,
                                      margin=1.0, tile_b=8)
    jax.block_until_ready((cont, ce1, ce2))

    r_cont, r_ce1, r_ce2 = _reference(feature1, feature2, output1, output2,
                                      label1, label2, sim_labels, margin=1.0)
    assert jnp.allclose(cont, r_cont, atol=1e-5), (cont, r_cont)
    assert jnp.allclose(ce1, r_ce1, atol=1e-5), (ce1, r_ce1)
    assert jnp.allclose(ce2, r_ce2, atol=1e-5), (ce2, r_ce2)

    print("KERNEL_OK")
</pallas_src>

<mosaic_0001>
module attributes {stable_mosaic.version = 11 : i64} {
  func.func @_contrastive_kernel(%arg0: i32, %arg1: i32, %arg2: memref<8x32xf32, #tpu.memory_space<vmem>>, %arg3: memref<8x32xf32, #tpu.memory_space<vmem>>, %arg4: memref<8x10xf32, #tpu.memory_space<vmem>>, %arg5: memref<8x10xf32, #tpu.memory_space<vmem>>, %arg6: memref<8x3xf32, #tpu.memory_space<vmem>>, %arg7: memref<1x8x128xf32, #tpu.memory_space<vmem>>) attributes {dimension_semantics = [#tpu.dimension_semantics<parallel>, #tpu.dimension_semantics<arbitrary>], iteration_bounds = array<i64: 2, 1>, scalar_prefetch = 0 : i64, scratch_operands = 0 : i64, tpu.core_type = #tpu.core_type<tc>, window_params = [{transform_indices = @transform_0, window_bounds = array<i64: 8, 32>}, {transform_indices = @transform_1, window_bounds = array<i64: 8, 32>}, {transform_indices = @transform_2, window_bounds = array<i64: 8, 10>}, {transform_indices = @transform_3, window_bounds = array<i64: 8, 10>}, {transform_indices = @transform_4, window_bounds = array<i64: 8, 3>}, {transform_indices = @transform_5, window_bounds = array<i64: 1, 8, 128>}]} {
    %c0_i32 = arith.constant 0 : i32
    %0 = arith.cmpi eq, %arg1, %c0_i32 : i32
    %1 = arith.extui %0 : i1 to i32
    %c0_i32_0 = arith.constant 0 : i32
    %2 = arith.cmpi ne, %1, %c0_i32_0 : i32
    scf.if %2 {
      %cst_40 = arith.constant 0.000000e+00 : f32
      %127 = vector.broadcast %cst_40 : f32 to vector<1x8x128xf32>
      %c0_41 = arith.constant 0 : index
      %c0_42 = arith.constant 0 : index
      %c0_43 = arith.constant 0 : index
      %128 = vector.load %arg7[%c0_41, %c0_42, %c0_43] : memref<1x8x128xf32, #tpu.memory_space<vmem>>, vector<1x8x128xf32>
      tpu.vector_store %arg7[%c0_41, %c0_42, %c0_43], %127 {strides = array<i32>} : memref<1x8x128xf32, #tpu.memory_space<vmem>>, vector<1x8x128xf32>,
    } else {
    }
    %c1_i32 = arith.constant 1 : i32
    %3 = arith.muli %arg0, %c1_i32 : i32
    %4 = arith.addi %3, %arg1 : i32
    %5 = tpu.iota {dimensions = array<i32: 0>} : vector<8x1xi32>
    %c8_i32 = arith.constant 8 : i32
    %6 = arith.muli %4, %c8_i32 : i32
    %7 = vector.broadcast %6 : i32 to vector<8x1xi32>
    %8 = arith.addi %5, %7 : vector<8x1xi32>
    %c12_i32 = arith.constant 12 : i32
    %9 = vector.broadcast %c12_i32 : i32 to vector<8x1xi32>
    %10 = arith.cmpi slt, %8, %9 : vector<8x1xi32>
    %11 = arith.extui %10 : vector<8x1xi1> to vector<8x1xi32>
    %12 = arith.sitofp %11 : vector<8x1xi32> to vector<8x1xf32>
    %c0 = arith.constant 0 : index
    %c0_1 = arith.constant 0 : index
    %13 = vector.load %arg6[%c0, %c0_1] : memref<8x3xf32, #tpu.memory_space<vmem>>, vector<8x3xf32>
    %cst = arith.constant 0.000000e+00 : f32
    %14 = vector.shape_cast %10 : vector<8x1xi1> to vector<8x1xi1>
    %15 = vector.broadcast %14 : vector<8x1xi1> to vector<8x3xi1>
    %16 = vector.broadcast %cst : f32 to vector<8x3xf32>
    %17 = arith.select %15, %13, %16 : vector<8x3xi1>, vector<8x3xf32>
    %18 = vector.extract_strided_slice %17 {offsets = [0, 0], sizes = [8, 1], strides = [1, 1]} : vector<8x3xf32> to vector<8x1xf32>
    %19 = arith.fptosi %18 : vector<8x1xf32> to vector<8x1xi32>
    %20 = vector.extract_strided_slice %17 {offsets = [0, 1], sizes = [8, 1], strides = [1, 1]} : vector<8x3xf32> to vector<8x1xf32>
    %21 = arith.fptosi %20 : vector<8x1xf32> to vector<8x1xi32>
    %22 = vector.extract_strided_slice %17 {offsets = [0, 2], sizes = [8, 1], strides = [1, 1]} : vector<8x3xf32> to vector<8x1xf32>
    %23 = tpu.iota {dimensions = array<i32: 1>} : vector<8x10xi32>
    %c0_2 = arith.constant 0 : index
    %c0_3 = arith.constant 0 : index
    %24 = vector.load %arg4[%c0_2, %c0_3] : memref<8x10xf32, #tpu.memory_space<vmem>>, vector<8x10xf32>
    %c0_i32_4 = arith.constant 0 : i32
    %25 = arith.sitofp %c0_i32_4 : i32 to f32
    %26 = vector.shape_cast %10 : vector<8x1xi1> to vector<8x1xi1>
    %27 = vector.broadcast %26 : vector<8x1xi1> to vector<8x10xi1>
    %28 = vector.broadcast %25 : f32 to vector<8x10xf32>
    %29 = arith.select %27, %24, %28 : vector<8x10xi1>, vector<8x10xf32>
    %cst_5 = arith.constant dense<0xFF800000> : vector<8xf32>
    %30 = vector.multi_reduction <maximumf>, %29, %cst_5 [1] : vector<8x10xf32> to vector<8xf32>
    %31 = vector.shape_cast %30 : vector<8xf32> to vector<8x1xf32>
    %32 = vector.broadcast %31 : vector<8x1xf32> to vector<8x10xf32>
    %33 = arith.subf %29, %32 : vector<8x10xf32>
    %34 = math.exp %33 : vector<8x10xf32>
    %cst_6 = arith.constant dense<0.000000e+00> : vector<8xf32>
    %35 = vector.multi_reduction <add>, %34, %cst_6 [1] : vector<8x10xf32> to vector<8xf32>
    %36 = vector.shape_cast %35 : vector<8xf32> to vector<8x1xf32>
    %37 = math.log %36 : vector<8x1xf32>
    %38 = arith.addf %31, %37 : vector<8x1xf32>
    %39 = vector.broadcast %19 : vector<8x1xi32> to vector<8x10xi32>
    %40 = arith.cmpi eq, %23, %39 : vector<8x10xi32>
    %cst_7 = arith.constant 0.000000e+00 : f32
    %41 = vector.broadcast %cst_7 : f32 to vector<8x10xf32>
    %42 = arith.select %40, %29, %41 : vector<8x10xi1>, vector<8x10xf32>
    %cst_8 = arith.constant dense<0.000000e+00> : vector<8xf32>
    %43 = vector.multi_reduction <add>, %42, %cst_8 [1] : vector<8x10xf32> to vector<8xf32>
    %44 = vector.shape_cast %43 : vector<8xf32> to vector<8x1xf32>
    %45 = arith.subf %38, %44 : vector<8x1xf32>
    %46 = arith.mulf %45, %12 : vector<8x1xf32>
    %47 = vector.shape_cast %46 : vector<8x1xf32> to vector<1x8x1xf32>
    %cst_9 = arith.constant dense<0.000000e+00> : vector<1xf32>
    %48 = vector.multi_reduction <add>, %47, %cst_9 [1, 2] : vector<1x8x1xf32> to vector<1xf32>
    %49 = vector.shape_cast %48 : vector<1xf32> to vector<1x1x1xf32>
    %50 = vector.extract %49[0, 0, 0] : f32 from vector<1x1x1xf32>
    %c0_10 = arith.constant 0 : index
    %c0_11 = arith.constant 0 : index
    %51 = vector.load %arg5[%c0_10, %c0_11] : memref<8x10xf32, #tpu.memory_space<vmem>>, vector<8x10xf32>
    %c0_i32_12 = arith.constant 0 : i32
    %52 = arith.sitofp %c0_i32_12 : i32 to f32
    %53 = vector.shape_cast %10 : vector<8x1xi1> to vector<8x1xi1>
    %54 = vector.broadcast %53 : vector<8x1xi1> to vector<8x10xi1>
    %55 = vector.broadcast %52 : f32 to vector<8x10xf32>
    %56 = arith.select %54, %51, %55 : vector<8x10xi1>, vector<8x10xf32>
    %cst_13 = arith.constant dense<0xFF800000> : vector<8xf32>
    %57 = vector.multi_reduction <maximumf>, %56, %cst_13 [1] : vector<8x10xf32> to vector<8xf32>
    %58 = vector.shape_cast %57 : vector<8xf32> to vector<8x1xf32>
    %59 = vector.broadcast %58 : vector<8x1xf32> to vector<8x10xf32>
    %60 = arith.subf %56, %59 : vector<8x10xf32>
    %61 = math.exp %60 : vector<8x10xf32>
    %cst_14 = arith.constant dense<0.000000e+00> : vector<8xf32>
    %62 = vector.multi_reduction <add>, %61, %cst_14 [1] : vector<8x10xf32> to vector<8xf32>
    %63 = vector.shape_cast %62 : vector<8xf32> to vector<8x1xf32>
    %64 = math.log %63 : vector<8x1xf32>
    %65 = arith.addf %58, %64 : vector<8x1xf32>
    %66 = vector.broadcast %21 : vector<8x1xi32> to vector<8x10xi32>
    %67 = arith.cmpi eq, %23, %66 : vector<8x10xi32>
    %cst_15 = arith.constant 0.000000e+00 : f32
    %68 = vector.broadcast %cst_15 : f32 to vector<8x10xf32>
    %69 = arith.select %67, %56, %68 : vector<8x10xi1>, vector<8x10xf32>
    %cst_16 = arith.constant dense<0.000000e+00> : vector<8xf32>
    %70 = vector.multi_reduction <add>, %69, %cst_16 [1] : vector<8x10xf32> to vector<8xf32>
    %71 = vector.shape_cast %70 : vector<8xf32> to vector<8x1xf32>
    %72 = arith.subf %65, %71 : vector<8x1xf32>
    %73 = arith.mulf %72, %12 : vector<8x1xf32>
    %74 = vector.shape_cast %73 : vector<8x1xf32> to vector<1x8x1xf32>
    %cst_17 = arith.constant dense<0.000000e+00> : vector<1xf32>
    %75 = vector.multi_reduction <add>, %74, %cst_17 [1, 2] : vector<1x8x1xf32> to vector<1xf32>
    %76 = vector.shape_cast %75 : vector<1xf32> to vector<1x1x1xf32>
    %77 = vector.extract %76[0, 0, 0] : f32 from vector<1x1x1xf32>
    %c0_18 = arith.constant 0 : index
    %c0_19 = arith.constant 0 : index
    %78 = vector.load %arg2[%c0_18, %c0_19] : memref<8x32xf32, #tpu.memory_space<vmem>>, vector<8x32xf32>
    %c0_20 = arith.constant 0 : index
    %c0_21 = arith.constant 0 : index
    %79 = vector.load %arg3[%c0_20, %c0_21] : memref<8x32xf32, #tpu.memory_space<vmem>>, vector<8x32xf32>
    %80 = arith.subf %78, %79 : vector<8x32xf32>
    %cst_22 = arith.constant 9.99999997E-7 : f32
    %81 = vector.broadcast %cst_22 : f32 to vector<8x32xf32>
    %82 = arith.addf %80, %81 : vector<8x32xf32>
    %cst_23 = arith.constant 0.000000e+00 : f32
    %83 = vector.shape_cast %10 : vector<8x1xi1> to vector<8x1xi1>
    %84 = vector.broadcast %83 : vector<8x1xi1> to vector<8x32xi1>
    %85 = vector.broadcast %cst_23 : f32 to vector<8x32xf32>
    %86 = arith.select %84, %82, %85 : vector<8x32xi1>, vector<8x32xf32>
    %87 = arith.mulf %86, %86 : vector<8x32xf32>
    %cst_24 = arith.constant dense<0.000000e+00> : vector<8xf32>
    %88 = vector.multi_reduction <add>, %87, %cst_24 [1] : vector<8x32xf32> to vector<8xf32>
    %89 = vector.shape_cast %88 : vector<8xf32> to vector<8x1xf32>
    %90 = math.sqrt %89 : vector<8x1xf32>
    %cst_25 = arith.constant 1.000000e+00 : f32
    %91 = vector.broadcast %cst_25 : f32 to vector<8x1xf32>
    %92 = arith.subf %91, %90 : vector<8x1xf32>
    %cst_26 = arith.constant 0.000000e+00 : f32
    %93 = vector.broadcast %cst_26 : f32 to vector<8x1xf32>
    %94 = arith.maximumf %92, %93 : vector<8x1xf32>
    %cst_27 = arith.constant 1.000000e+00 : f32
    %95 = vector.broadcast %cst_27 : f32 to vector<8x1xf32>
    %96 = arith.subf %95, %22 : vector<8x1xf32>
    %97 = arith.mulf %96, %89 : vector<8x1xf32>
    %98 = arith.mulf %94, %94 : vector<8x1xf32>
    %99 = arith.mulf %22, %98 : vector<8x1xf32>
    %100 = arith.addf %97, %99 : vector<8x1xf32>
    %101 = arith.mulf %100, %12 : vector<8x1xf32>
    %102 = vector.shape_cast %101 : vector<8x1xf32> to vector<1x8x1xf32>
    %cst_28 = arith.constant dense<0.000000e+00> : vector<1xf32>
    %103 = vector.multi_reduction <add>, %102, %cst_28 [1, 2] : vector<1x8x1xf32> to vector<1xf32>
    %104 = vector.shape_cast %103 : vector<1xf32> to vector<1x1x1xf32>
    %105 = vector.extract %104[0, 0, 0] : f32 from vector<1x1x1xf32>
    %106 = tpu.iota {dimensions = array<i32: 2>} : vector<1x8x128xi32>
    %c0_i32_29 = arith.constant 0 : i32
    %107 = vector.broadcast %c0_i32_29 : i32 to vector<1x8x128xi32>
    %108 = arith.cmpi eq, %106, %107 : vector<1x8x128xi32>
    %cst_30 = arith.constant 0.000000e+00 : f32
    %109 = vector.broadcast %105 : f32 to vector<1x8x128xf32>
    %110 = vector.broadcast %cst_30 : f32 to vector<1x8x128xf32>
    %111 = arith.select %108, %109, %110 : vector<1x8x128xi1>, vector<1x8x128xf32>
    %c1_i32_31 = arith.constant 1 : i32
    %112 = vector.broadcast %c1_i32_31 : i32 to vector<1x8x128xi32>
    %113 = arith.cmpi eq, %106, %112 : vector<1x8x128xi32>
    %cst_32 = arith.constant 0.000000e+00 : f32
    %114 = vector.broadcast %50 : f32 to vector<1x8x128xf32>
    %115 = vector.broadcast %cst_32 : f32 to vector<1x8x128xf32>
    %116 = arith.select %113, %114, %115 : vector<1x8x128xi1>, vector<1x8x128xf32>
    %117 = arith.addf %111, %116 : vector<1x8x128xf32>
    %c2_i32 = arith.constant 2 : i32
    %118 = vector.broadcast %c2_i32 : i32 to vector<1x8x128xi32>
    %119 = arith.cmpi eq, %106, %118 : vector<1x8x128xi32>
    %cst_33 = arith.constant 0.000000e+00 : f32
    %120 = vector.broadcast %77 : f32 to vector<1x8x128xf32>
    %121 = vector.broadcast %cst_33 : f32 to vector<1x8x128xf32>
    %122 = arith.select %119, %120, %121 : vector<1x8x128xi1>, vector<1x8x128xf32>
    %123 = arith.addf %117, %122 : vector<1x8x128xf32>
    %c0_34 = arith.constant 0 : index
    %c0_35 = arith.constant 0 : index
    %c0_36 = arith.constant 0 : index
    %124 = vector.load %arg7[%c0_34, %c0_35, %c0_36] : memref<1x8x128xf32, #tpu.memory_space<vmem>>, vector<1x8x128xf32>
    %125 = arith.addf %124, %123 : vector<1x8x128xf32>
    %c0_37 = arith.constant 0 : index
    %c0_38 = arith.constant 0 : index
    %c0_39 = arith.constant 0 : index
    %126 = vector.load %arg7[%c0_37, %c0_38, %c0_39] : memref<1x8x128xf32, #tpu.memory_space<vmem>>, vector<1x8x128xf32>
    tpu.vector_store %arg7[%c0_37, %c0_38, %c0_39], %125 {strides = array<i32>} : memref<1x8x128xf32, #tpu.memory_space<vmem>>, vector<1x8x128xf32>,
    return
  }
  func.func @transform_0(%arg0: i32, %arg1: i32) -> (i32, i32) {
    %c1_i32 = arith.constant 1 : i32
    %0 = arith.muli %arg0, %c1_i32 : i32
    %1 = arith.addi %0, %arg1 : i32
    %c1_i32_0 = arith.constant 1 : i32
    %2 = arith.minsi %1, %c1_i32_0 : i32
    %c0_i32 = arith.constant 0 : i32
    %c0_i32_1 = arith.constant 0 : i32
    return %2, %c0_i32 : i32, i32
  }
  func.func @transform_1(%arg0: i32, %arg1: i32) -> (i32, i32) {
    %c1_i32 = arith.constant 1 : i32
    %0 = arith.muli %arg0, %c1_i32 : i32
    %1 = arith.addi %0, %arg1 : i32
    %c1_i32_0 = arith.constant 1 : i32
    %2 = arith.minsi %1, %c1_i32_0 : i32
    %c0_i32 = arith.constant 0 : i32
    %c0_i32_1 = arith.constant 0 : i32
    return %2, %c0_i32 : i32, i32
  }
  func.func @transform_2(%arg0: i32, %arg1: i32) -> (i32, i32) {
    %c1_i32 = arith.constant 1 : i32
    %0 = arith.muli %arg0, %c1_i32 : i32
    %1 = arith.addi %0, %arg1 : i32
    %c1_i32_0 = arith.constant 1 : i32
    %2 = arith.minsi %1, %c1_i32_0 : i32
    %c0_i32 = arith.constant 0 : i32
    %c0_i32_1 = arith.constant 0 : i32
    return %2, %c0_i32 : i32, i32
  }
  func.func @transform_3(%arg0: i32, %arg1: i32) -> (i32, i32) {
    %c1_i32 = arith.constant 1 : i32
    %0 = arith.muli %arg0, %c1_i32 : i32
    %1 = arith.addi %0, %arg1 : i32
    %c1_i32_0 = arith.constant 1 : i32
    %2 = arith.minsi %1, %c1_i32_0 : i32
    %c0_i32 = arith.constant 0 : i32
    %c0_i32_1 = arith.constant 0 : i32
    return %2, %c0_i32 : i32, i32
  }
  func.func @transform_4(%arg0: i32, %arg1: i32) -> (i32, i32) {
    %c1_i32 = arith.constant 1 : i32
    %0 = arith.muli %arg0, %c1_i32 : i32
    %1 = arith.addi %0, %arg1 : i32
    %c1_i32_0 = arith.constant 1 : i32
    %2 = arith.minsi %1, %c1_i32_0 : i32
    %c0_i32 = arith.constant 0 : i32
    %c0_i32_1 = arith.constant 0 : i32
    return %2, %c0_i32 : i32, i32
  }
  func.func @transform_5(%arg0: i32, %arg1: i32) -> (i32, i32, i32) {
    %c0_i32 = arith.constant 0 : i32
    %c0_i32_0 = arith.constant 0 : i32
    %c0_i32_1 = arith.constant 0 : i32
    return %arg0, %c0_i32, %c0_i32_0 : i32, i32, i32
  }
}

</mosaic_0001>

<llo_original>
// kernel: tpu_custom_call.1
$region0: #{tpu_custom_call.1}
  #allocation0 [shape = 'u32[]', space=smem, size = 0x4, offset = 0x4, fixed_abs, tag = 'smem constant byte address 0x4 - core index']
  #allocation1 [shape = 'u32[144,128]{1,0:T(1,128)}', space=vmem, size = 0x12000, scoped, tag = 'internal scratch']
  %s0 = inlined_call_operand.vmem [shape: f32[12,32], index: 0, kind: input, shape index: {}]
  %s1 = inlined_call_operand.hbm [shape: f32[12,32], index: 1, kind: input, shape index: {}]
  %s2 = inlined_call_operand.hbm [shape: f32[12,10], index: 2, kind: input, shape index: {}]
  %s3 = inlined_call_operand.hbm [shape: f32[12,10], index: 3, kind: input, shape index: {}]
  %s4 = inlined_call_operand.vmem [shape: f32[12,3], index: 4, kind: input, shape index: {}]
  %s5 = inlined_call_operand.hbm [shape: f32[2,8,128], index: 5, kind: output, shape index: {}]
  %s6 = sld [smem:[#allocation0]]
  $region69: #{tpu_custom_call.1} parent=0
    _
  %s8 = ssub.s32 1, %s6
  %s9 = scalar_select 0, %s8, %s6
  $region1: #{tpu_custom_call.1} parent=0
    #allocation2 [shape = 'u8[8192]{0}', space=vmem, size = 0x2000, scoped, tag = 'input window, operand 1']
    #allocation3 [shape = 's32[2]{0}', space=sflag, size = 0x8, scoped, tag = 'scoped memory for tpu_custom_call.1']
    #allocation4 [shape = 's32[2]{0}', space=sflag, size = 0x8, scoped, tag = 'scoped memory for tpu_custom_call.1']
    #allocation5 [shape = 'u8[8192]{0}', space=vmem, size = 0x2000, scoped, tag = 'input window, operand 2']
    #allocation6 [shape = 's32[2]{0}', space=sflag, size = 0x8, scoped, tag = 'scoped memory for tpu_custom_call.1']
    #allocation7 [shape = 'u8[8192]{0}', space=vmem, size = 0x2000, scoped, tag = 'input window, operand 3']
    #allocation8 [shape = 'u8[8192]{0}', space=vmem, size = 0x2000, scoped, tag = 'output window, operand 0']
    %10 = vsyncpa [#allocation3], 0
    %s11 = scalar_lea.sflag [#allocation3], 1
    %12 = vsyncpa %s11, 0
    %13 = vsyncpa [#allocation6], 0
    %s14 = scalar_lea.sflag [#allocation6], 1
    %15 = vsyncpa %s14, 0
    %16 = vsyncpa [#allocation4], 0
    %s17 = scalar_lea.sflag [#allocation4], 1
    %18 = vsyncpa %s17, 0
    loop: start=0, step=1, limit=4
    $region2: #{tpu_custom_call.1} parent=1 // loop_pre_header
      _
    $region3: #{tpu_custom_call.1} parent=1 // loop_header
      %s20 = sphi 0, %s24
      %p21 = scmp.ge.s32.totalorder %s20, 4
      %s27 = sphi 0, %s39
      %s28 = sphi 0, %s35
      %s29 = sphi 0, %s27
      %s30 = sphi 0, %s28
      %s31 = sphi 0, %s29
      %s32 = sphi 0, %s30
      %s48 = sphi 0, %s50
      %s51 = sphi 0, %s48
      %s52 = sphi 0, %s51
      %s68 = sphi 0, %s52
      %s80 = sphi 0, %s82
      %s83 = sphi 0, %s80
      %s84 = sphi 0, %s83
      %s100 = sphi 0, %s84
      %s112 = sphi 0, %s114
      %s115 = sphi 0, %s112
      %s116 = sphi 0, %s115
      %s132 = sphi 0, %s116
      %s144 = sphi 0, %s146
      %s147 = sphi 0, %s144
      %s148 = sphi 0, %s147
      %s164 = sphi 0, %s148
      %s176 = sphi 0, %s178
      %s179 = sphi 0, %s176
      %s180 = sphi 0, %s179
      %s196 = sphi 0, %s180
      %s202 = sphi 0, %s204
      %s205 = sphi 0, %s202
      %s206 = sphi 0, %s205
      %s222 = sphi 0, %s206
    $region4: #{tpu_custom_call.1} parent=1 // loop_header_branch
      %23 = sbr.rel (%p21) target = $region8
    $region5: #{tpu_custom_call.1} parent=1 // loop_body
      %s25 = ssub.s32 %s20, 1
      %s26 = ssub.s32 %s20, 2
      %s33 = sadd.s32 1, %s28
      %p34 = scmp.ge.s32.totalorder %s33, 1
      %s35 = scalar_select %p34, 0, %s33
      %s36 = sadd.s32 1, %s27
      %s37 = scalar_select %p34, %s36, %s27
      %p38 = scmp.ge.s32.totalorder %s37, 2
      %s39 = scalar_select %p38, 0, %s37
      %s40 = sadd.s32 %s27, %s28
      %p41 = scmp.lt.s32.totalorder %s40, 1
      %s42 = scalar_select %p41, %s40, 1
      %s43 = sadd.s32 %s39, %s35
      %p44 = scmp.lt.s32.totalorder %s43, 1
      %s45 = scalar_select %p44, %s43, 1
      %s46 = ssub.s32 %s42, %s45
      %p47 = scmp.eq.s32.totalorder %s46, 0
      %s49 = sadd.s32 %s48, 1
      %s50 = scalar_select %p47, %s48, %s49
      %p53 = pneg %p47
      %p54 = scmp.eq.s32.totalorder %s20, 1
      %p55 = por %p53, %p54
      %p56 = scmp.ne.s32.totalorder %s48, %s51
      %p57 = scmp.eq.s32.totalorder %s20, 0
      %p58 = por %p56, %p57
      %p59 = scmp.ne.s32.totalorder %s48, %s51
      %p60 = scmp.eq.s32.totalorder %s25, 1
      %p61 = por %p59, %p60
      %p62 = scmp.ne.s32.totalorder %s51, %s52
      %p63 = scmp.eq.s32.totalorder %s25, 0
      %p64 = por %p62, %p63
      %p65 = scmp.ne.s32.totalorder %s51, %s52
      %p66 = scmp.eq.s32.totalorder %s26, 1
      %p67 = por %p65, %p66
      %p69 = scmp.ne.s32.totalorder %s52, %s68
      %p70 = scmp.eq.s32.totalorder %s26, 0
      %p71 = por %p69, %p70
      %s72 = sadd.s32 %s27, %s28
      %p73 = scmp.lt.s32.totalorder %s72, 1
      %s74 = scalar_select %p73, %s72, 1
      %s75 = sadd.s32 %s39, %s35
      %p76 = scmp.lt.s32.totalorder %s75, 1
      %s77 = scalar_select %p76, %s75, 1
      %s78 = ssub.s32 %s74, %s77
      %p79 = scmp.eq.s32.totalorder %s78, 0
      %s81 = sadd.s32 %s80, 1
      %s82 = scalar_select %p79, %s80, %s81
      %p85 = pneg %p79
      %p86 = scmp.eq.s32.totalorder %s20, 1
      %p87 = por %p85, %p86
      %p88 = scmp.ne.s32.totalorder %s80, %s83
      %p89 = scmp.eq.s32.totalorder %s20, 0
      %p90 = por %p88, %p89
      %p91 = scmp.ne.s32.totalorder %s80, %s83
      %p92 = scmp.eq.s32.totalorder %s25, 1
      %p93 = por %p91, %p92
      %p94 = scmp.ne.s32.totalorder %s83, %s84
      %p95 = scmp.eq.s32.totalorder %s25, 0
      %p96 = por %p94, %p95
      %p97 = scmp.ne.s32.totalorder %s83, %s84
      %p98 = scmp.eq.s32.totalorder %s26, 1
      %p99 = por %p97, %p98
      %p101 = scmp.ne.s32.totalorder %s84, %s100
      %p102 = scmp.eq.s32.totalorder %s26, 0
      %p103 = por %p101, %p102
      %s104 = sadd.s32 %s27, %s28
      %p105 = scmp.lt.s32.totalorder %s104, 1
      %s106 = scalar_select %p105, %s104, 1
      %s107 = sadd.s32 %s39, %s35
      %p108 = scmp.lt.s32.totalorder %s107, 1
      %s109 = scalar_select %p108, %s107, 1
      %s110 = ssub.s32 %s106, %s109
      %p111 = scmp.eq.s32.totalorder %s110, 0
      %s113 = sadd.s32 %s112, 1
      %s114 = scalar_select %p111, %s112, %s113
      %p117 = pneg %p111
      %p118 = scmp.eq.s32.totalorder %s20, 1
      %p119 = por %p117, %p118
      %p120 = scmp.ne.s32.totalorder %s112, %s115
      %p121 = scmp.eq.s32.totalorder %s20, 0
      %p122 = por %p120, %p121
      %p123 = scmp.ne.s32.totalorder %s112, %s115
      %p124 = scmp.eq.s32.totalorder %s25, 1
      %p125 = por %p123, %p124
      %p126 = scmp.ne.s32.totalorder %s115, %s116
      %p127 = scmp.eq.s32.totalorder %s25, 0
      %p128 = por %p126, %p127
      %p129 = scmp.ne.s32.totalorder %s115, %s116
      %p130 = scmp.eq.s32.totalorder %s26, 1
      %p131 = por %p129, %p130
      %p133 = scmp.ne.s32.totalorder %s116, %s132
      %p134 = scmp.eq.s32.totalorder %s26, 0
      %p135 = por %p133, %p134
      %s136 = sadd.s32 %s27, %s28
      %p137 = scmp.lt.s32.totalorder %s136, 1
      %s138 = scalar_select %p137, %s136, 1
      %s139 = sadd.s32 %s39, %s35
      %p140 = scmp.lt.s32.totalorder %s139, 1
      %s141 = scalar_select %p140, %s139, 1
      %s142 = ssub.s32 %s138, %s141
      %p143 = scmp.eq.s32.totalorder %s142, 0
      %s145 = sadd.s32 %s144, 1
      %s146 = scalar_select %p143, %s144, %s145
      %p149 = pneg %p143
      %p150 = scmp.eq.s32.totalorder %s20, 1
      %p151 = por %p149, %p150
      %p152 = scmp.ne.s32.totalorder %s144, %s147
      %p153 = scmp.eq.s32.totalorder %s20, 0
      %p154 = por %p152, %p153
      %p155 = scmp.ne.s32.totalorder %s144, %s147
      %p156 = scmp.eq.s32.totalorder %s25, 1
      %p157 = por %p155, %p156
      %p158 = scmp.ne.s32.totalorder %s147, %s148
      %p159 = scmp.eq.s32.totalorder %s25, 0
      %p160 = por %p158, %p159
      %p161 = scmp.ne.s32.totalorder %s147, %s148
      %p162 = scmp.eq.s32.totalorder %s26, 1
      %p163 = por %p161, %p162
      %p165 = scmp.ne.s32.totalorder %s148, %s164
      %p166 = scmp.eq.s32.totalorder %s26, 0
      %p167 = por %p165, %p166
      %s168 = sadd.s32 %s27, %s28
      %p169 = scmp.lt.s32.totalorder %s168, 1
      %s170 = scalar_select %p169, %s168, 1
      %s171 = sadd.s32 %s39, %s35
      %p172 = scmp.lt.s32.totalorder %s171, 1
      %s173 = scalar_select %p172, %s171, 1
      %s174 = ssub.s32 %s170, %s173
      %p175 = scmp.eq.s32.totalorder %s174, 0
      %s177 = sadd.s32 %s176, 1
      %s178 = scalar_select %p175, %s176, %s177
      %p181 = pneg %p175
      %p182 = scmp.eq.s32.totalorder %s20, 1
      %p183 = por %p181, %p182
      %p184 = scmp.ne.s32.totalorder %s176, %s179
      %p185 = scmp.eq.s32.totalorder %s20, 0
      %p186 = por %p184, %p185
      %p187 = scmp.ne.s32.totalorder %s176, %s179
      %p188 = scmp.eq.s32.totalorder %s25, 1
      %p189 = por %p187, %p188
      %p190 = scmp.ne.s32.totalorder %s179, %s180
      %p191 = scmp.eq.s32.totalorder %s25, 0
      %p192 = por %p190, %p191
      %p193 = scmp.ne.s32.totalorder %s179, %s180
      %p194 = scmp.eq.s32.totalorder %s26, 1
      %p195 = por %p193, %p194
      %p197 = scmp.ne.s32.totalorder %s180, %s196
      %p198 = scmp.eq.s32.totalorder %s26, 0
      %p199 = por %p197, %p198
      %s200 = ssub.s32 %s27, %s39
      %p201 = scmp.eq.s32.totalorder %s200, 0
      %s203 = sadd.s32 %s202, 1
      %s204 = scalar_select %p201, %s202, %s203
      %p207 = pneg %p201
      %p208 = scmp.eq.s32.totalorder %s20, 1
      %p209 = por %p207, %p208
      %p210 = scmp.ne.s32.totalorder %s202, %s205
      %p211 = scmp.eq.s32.totalorder %s20, 0
      %p212 = por %p210, %p211
      %p213 = scmp.ne.s32.totalorder %s202, %s205
      %p214 = scmp.eq.s32.totalorder %s25, 1
      %p215 = por %p213, %p214
      %p216 = scmp.ne.s32.totalorder %s205, %s206
      %p217 = scmp.eq.s32.totalorder %s25, 0
      %p218 = por %p216, %p217
      %p219 = scmp.ne.s32.totalorder %s205, %s206
      %p220 = scmp.eq.s32.totalorder %s26, 1
      %p221 = por %p219, %p220
      %p223 = scmp.ne.s32.totalorder %s206, %s222
      %p224 = scmp.eq.s32.totalorder %s26, 0
      %p225 = por %p223, %p224
      %p226 = scmp.le.s32.totalorder 1, %s20
      %p227 = scmp.lt.s32.totalorder %s20, 3
      %p228 = pnand %p226, %p227
      %p229 = pneg %p228
      // Predicated region
      $region9: #{tpu_custom_call.1} parent=5 // pred_check
        _
      $region10: #{tpu_custom_call.1} parent=5 // pred_check_branch
        %231 = sbr.rel (%p228) target = $region12
      $region11: #{tpu_custom_call.1} parent=5 // pred_region
        %s232 = ssub.s32 %s20, 1
      $region12: #{tpu_custom_call.1} parent=5 // pred_fallthru
        _
      %p233 = scmp.lt.s32.totalorder %s20, 2
      // Predicated region
      $region13: #{tpu_custom_call.1} parent=5 // pred_check
        %p234 = pneg %p233
      $region14: #{tpu_custom_call.1} parent=5 // pred_check_branch
        %236 = sbr.rel (%p234) target = $region16
      $region15: #{tpu_custom_call.1} parent=5 // pred_region
        // Predicated region
        $region17: #{tpu_custom_call.1} parent=15 // pred_check
          %p237 = pneg %p58
        $region18: #{tpu_custom_call.1} parent=15 // pred_check_branch
          %239 = sbr.rel (%p237) target = $region20
        $region19: #{tpu_custom_call.1} parent=15 // pred_region
          %s240 = sadd.s32 %s27, %s28
          %p241 = scmp.lt.s32.totalorder %s240, 1
          %s242 = scalar_select %p241, %s240, 1
          %p243 = scmp.lt.s32.totalorder %s242, 1
          %s244 = scalar_select %p243, %s242, 1
          %s245 = smul.addr %s244, 8
          %s246 = scalar_lea.vmem %s0, %s245
          %s247 = sadd.s32 %s27, %s28
          %p248 = scmp.lt.s32.totalorder %s247, 1
          %s249 = scalar_select %p248, %s247, 1
        $region20: #{tpu_custom_call.1} parent=15 // pred_fallthru
          _
        // Predicated region
        $region21: #{tpu_custom_call.1} parent=15 // pred_check
          %p250 = pneg %p90
        $region22: #{tpu_custom_call.1} parent=15 // pred_check_branch
          %252 = sbr.rel (%p250) target = $region24
        $region23: #{tpu_custom_call.1} parent=15 // pred_region
          %s253 = sand.u32 %s80, 1
          %s254 = scalar_lea.sflag [#allocation3], %s253
          %s255 = sand.u32 %s80, 1
          %s256 = smul.addr %s255, 8
          %s257 = scalar_lea.vmem [#allocation2], %s256
          %s258 = sadd.s32 %s27, %s28
          %p259 = scmp.lt.s32.totalorder %s258, 1
          %s260 = scalar_select %p259, %s258, 1
          %s262 = ssub.s32 128, 128
          %263 = vsyncadd %s254, %s262
          %s264 = smul.addr %s260, 128
          %s265 = scalar_lea.hbm %s1, %s264
          %s267 = sshll.u32 %s257, 4
          %s268 = int_to_ptr.vmem [resolvable:$true] %s267
          %270 = dma.hbm_to_vmem [thread:$0]  %s265, 128, %s268, %s254
        $region24: #{tpu_custom_call.1} parent=15 // pred_fallthru
          _
        // Predicated region
        $region25: #{tpu_custom_call.1} parent=15 // pred_check
          %p271 = pneg %p122
        $region26: #{tpu_custom_call.1} parent=15 // pred_check_branch
          %273 = sbr.rel (%p271) target = $region28
        $region27: #{tpu_custom_call.1} parent=15 // pred_region
          %s274 = sand.u32 %s20, 1
          %s275 = scalar_lea.sflag [#allocation6], %s274
          %s276 = sand.u32 %s112, 1
          %s277 = smul.addr %s276, 8
          %s278 = scalar_lea.vmem [#allocation5], %s277
          %s279 = sadd.s32 %s27, %s28
          %p280 = scmp.lt.s32.totalorder %s279, 1
          %s281 = scalar_select %p280, %s279, 1
          %s283 = ssub.s32 128, 128
          %284 = vsyncadd %s275, %s283
          %s285 = smul.addr %s281, 128
          %s286 = scalar_lea.hbm %s2, %s285
          %s288 = sshll.u32 %s278, 4
          %s289 = int_to_ptr.vmem [resolvable:$true] %s288
          %291 = dma.hbm_to_vmem [thread:$0]  %s286, 128, %s289, %s275
        $region28: #{tpu_custom_call.1} parent=15 // pred_fallthru
          _
        // Predicated region
        $region29: #{tpu_custom_call.1} parent=15 // pred_check
          %p292 = pneg %p154
        $region30: #{tpu_custom_call.1} parent=15 // pred_check_branch
          %294 = sbr.rel (%p292) target = $region32
        $region31: #{tpu_custom_call.1} parent=15 // pred_region
          %s295 = sand.u32 %s20, 1
          %s296 = scalar_lea.sflag [#allocation6], %s295
          %s297 = sand.u32 %s144, 1
          %s298 = smul.addr %s297, 8
          %s299 = scalar_lea.vmem [#allocation7], %s298
          %s300 = sadd.s32 %s27, %s28
          %p301 = scmp.lt.s32.totalorder %s300, 1
          %s302 = scalar_select %p301, %s300, 1
          %s304 = ssub.s32 128, 128
          %305 = vsyncadd %s296, %s304
          %s306 = smul.addr %s302, 128
          %s307 = scalar_lea.hbm %s3, %s306
          %s309 = sshll.u32 %s299, 4
          %s310 = int_to_ptr.vmem [resolvable:$true] %s309
          %312 = dma.hbm_to_vmem [thread:$0]  %s307, 128, %s310, %s296
        $region32: #{tpu_custom_call.1} parent=15 // pred_fallthru
          _
        // Predicated region
        $region33: #{tpu_custom_call.1} parent=15 // pred_check
          %p313 = pneg %p186
        $region34: #{tpu_custom_call.1} parent=15 // pred_check_branch
          %315 = sbr.rel (%p313) target = $region36
        $region35: #{tpu_custom_call.1} parent=15 // pred_region
          %s316 = sadd.s32 %s27, %s28
          %p317 = scmp.lt.s32.totalorder %s316, 1
          %s318 = scalar_select %p317, %s316, 1
          %p319 = scmp.lt.s32.totalorder %s318, 1
          %s320 = scalar_select %p319, %s318, 1
          %s321 = smul.addr %s320, 8
          %s322 = scalar_lea.vmem %s4, %s321
          %s323 = sadd.s32 %s27, %s28
          %p324 = scmp.lt.s32.totalorder %s323, 1
          %s325 = scalar_select %p324, %s323, 1
        $region36: #{tpu_custom_call.1} parent=15 // pred_fallthru
          _
      $region16: #{tpu_custom_call.1} parent=5 // pred_fallthru
        _
      %p326 = scmp.le.s32.totalorder 1, %s20
      %p327 = scmp.lt.s32.totalorder %s20, 3
      %p328 = pnand %p326, %p327
      %p329 = pneg %p328
      // Predicated region
      $region37: #{tpu_custom_call.1} parent=5 // pred_check
        _
      $region38: #{tpu_custom_call.1} parent=5 // pred_check_branch
        %331 = sbr.rel (%p328) target = $region40
      $region39: #{tpu_custom_call.1} parent=5 // pred_region
        %s332 = ssub.s32 %s20, 1
        %s333 = sand.u32 %s83, 1
        %s334 = scalar_lea.sflag [#allocation3], %s333
        %s335 = sand.u32 %s83, 1
        %s336 = smul.addr %s335, 8
        %s337 = scalar_lea.vmem [#allocation2], %s336
        // Predicated region
        $region41: #{tpu_custom_call.1} parent=39 // pred_check
          %p338 = pneg %p96
        $region42: #{tpu_custom_call.1} parent=39 // pred_check_branch
          %340 = sbr.rel (%p338) target = $region44
        $region43: #{tpu_custom_call.1} parent=39 // pred_region
          %341 = dma.done %s334, 128
        $region44: #{tpu_custom_call.1} parent=39 // pred_fallthru
          _
        %s342 = sand.u32 %s25, 1
        %s343 = scalar_lea.sflag [#allocation6], %s342
        %s344 = sand.u32 %s115, 1
        %s345 = smul.addr %s344, 8
        %s346 = scalar_lea.vmem [#allocation5], %s345
        // Predicated region
        $region45: #{tpu_custom_call.1} parent=39 // pred_check
          %p347 = pneg %p128
        $region46: #{tpu_custom_call.1} parent=39 // pred_check_branch
          %349 = sbr.rel (%p347) target = $region48
        $region47: #{tpu_custom_call.1} parent=39 // pred_region
          %350 = dma.done %s343, 128
        $region48: #{tpu_custom_call.1} parent=39 // pred_fallthru
          _
        %s351 = sand.u32 %s25, 1
        %s352 = scalar_lea.sflag [#allocation6], %s351
        %s353 = sand.u32 %s147, 1
        %s354 = smul.addr %s353, 8
        %s355 = scalar_lea.vmem [#allocation7], %s354
        // Predicated region
        $region49: #{tpu_custom_call.1} parent=39 // pred_check
          %p356 = pneg %p160
        $region50: #{tpu_custom_call.1} parent=39 // pred_check_branch
          %358 = sbr.rel (%p356) target = $region52
        $region51: #{tpu_custom_call.1} parent=39 // pred_region
          %359 = dma.done %s352, 128
        $region52: #{tpu_custom_call.1} parent=39 // pred_fallthru
          _
        %s360 = sadd.s32 %s29, %s30
        %p361 = scmp.lt.s32.totalorder %s360, 1
        %s362 = scalar_select %p361, %s360, 1
        %p363 = scmp.lt.s32.totalorder %s362, 1
        %s364 = scalar_select %p363, %s362, 1
        %s365 = smul.addr %s364, 8
        %s366 = scalar_lea.vmem %s0, %s365
        %p367 = pneg %p64
        %p368 = pneg %p61
        %s369 = sand.u32 %s83, 1
        %s370 = scalar_lea.sflag [#allocation3], %s369
        %s371 = sand.u32 %s83, 1
        %s372 = smul.addr %s371, 8
        %s373 = scalar_lea.vmem [#allocation2], %s372
        %p374 = pneg %p96
        %p375 = pneg %p93
        %s376 = sand.u32 %s25, 1
        %s377 = scalar_lea.sflag [#allocation6], %s376
        %s378 = sand.u32 %s115, 1
        %s379 = smul.addr %s378, 8
        %s380 = scalar_lea.vmem [#allocation5], %s379
        %p381 = pneg %p128
        %p382 = pneg %p125
        %s383 = sand.u32 %s25, 1
        %s384 = scalar_lea.sflag [#allocation6], %s383
        %s385 = sand.u32 %s147, 1
        %s386 = smul.addr %s385, 8
        %s387 = scalar_lea.vmem [#allocation7], %s386
        %p388 = pneg %p160
        %p389 = pneg %p157
        %s390 = sadd.s32 %s29, %s30
        %p391 = scmp.lt.s32.totalorder %s390, 1
        %s392 = scalar_select %p391, %s390, 1
        %p393 = scmp.lt.s32.totalorder %s392, 1
        %s394 = scalar_select %p393, %s392, 1
        %s395 = smul.addr %s394, 8
        %s396 = scalar_lea.vmem %s4, %s395
        %p397 = pneg %p192
        %p398 = pneg %p189
        %p399 = pneg %p218
        %p400 = pneg %p215
        %s401 = sand.u32 %s205, 1
        %s402 = scalar_lea.sflag [#allocation4], %s401
        %s403 = sand.u32 %s205, 1
        %s404 = smul.addr %s403, 8
        %s405 = scalar_lea.vmem [#allocation8], %s404
        %s406 = sadd.s32 %s29, %s30
        %p407 = scmp.lt.s32.totalorder %s406, 1
        %s408 = scalar_select %p407, %s406, 1
        %p409 = scmp.lt.s32.totalorder %s408, 1
        %s410 = scalar_select %p409, %s408, 1
        %s411 = smul.addr %s410, 8
        %s412 = scalar_lea.vmem %s0, %s411
        %s413 = sadd.s32 %s29, %s30
        %p414 = scmp.lt.s32.totalorder %s413, 1
        %s415 = scalar_select %p414, %s413, 1
        %s416 = sadd.s32 %s29, %s30
        %p417 = scmp.lt.s32.totalorder %s416, 1
        %s418 = scalar_select %p417, %s416, 1
        %s419 = sadd.s32 %s29, %s30
        %p420 = scmp.lt.s32.totalorder %s419, 1
        %s421 = scalar_select %p420, %s419, 1
        %s422 = sadd.s32 %s29, %s30
        %p423 = scmp.lt.s32.totalorder %s422, 1
        %s424 = scalar_select %p423, %s422, 1
        %s425 = sadd.s32 %s29, %s30
        %p426 = scmp.lt.s32.totalorder %s425, 1
        %s427 = scalar_select %p426, %s425, 1
        %p428 = scmp.lt.s32.totalorder %s427, 1
        %s429 = scalar_select %p428, %s427, 1
        %s430 = smul.addr %s429, 8
        %s431 = scalar_lea.vmem %s4, %s430
        %s432 = sadd.s32 %s29, %s30
        %p433 = scmp.lt.s32.totalorder %s432, 1
        %s434 = scalar_select %p433, %s432, 1
        %p435 = scmp.eq.s32.totalorder %s30, 0
        // Predicated region
        $region53: #{tpu_custom_call.1} parent=39 // pred_check
          %p436 = pneg %p435
        $region54: #{tpu_custom_call.1} parent=39 // pred_check_branch
          %438 = sbr.rel (%p436) target = $region56
        $region55: #{tpu_custom_call.1} parent=39 // pred_region
          %439 = vst [vmem:[%s405] sm:$0xff] 0.0
        $region56: #{tpu_custom_call.1} parent=39 // pred_fallthru
          _
        %s440 = sadd.s32 %s29, %s30
        %v441 = vlaneseq
        %v442 = vshrl.u32 %v441, 7
        %s443 = smul.u32 %s440, 8
        %v444 = vstv %s443
        %v445 = vadd.s32 %v442, %v444
        %vm446 = vcmp.lt.s32.totalorder %v445, 12
        %v447 = vsel %vm446, 1, 0
        %v448 = vcvt.s32.f32 %v447
        %v449 = vld [vmem:[%s431] sm:$0xff]
        %vm450 = vcmp.eq.s32.totalorder %v447, 1
        %v451 = vsel %vm450, %v449, 0.0
        %v452 = vcvt.f32.s32.to.zero.pseudo %v451
        %v453 = vlaneseq
        %v454 = vand.u32 %v453, 127
        %v455 = vld [vmem:[%s346] sm:$0xff]
        %v456 = vsel %vm450, %v455, 0.0
        %vm457 = vcmask 80896
        %v458 = vsel %vm457, %v456, -inf
        %459 = vmax.xlane.f32.xlu0 %v458
        %v460 = vpop.xlane.xlu0 %459
        %v461 = vsub.f32 %v456, %v460
        %v462 = vmul.f32 %v461, 1.442695
        %v463 = vpow.pop %v462
        %v464 = vsel %vm457, %v463, 0.0
        %465 = vadd.xlane.f32.xlu0 %v464
        %v466 = vpop.xlane.xlu0 %465
        %v467 = vlog2.pop %v466
        %v468 = vmul.f32 %v467, 0.6931472
        %v469 = vadd.f32 %v460, %v468
        %470 = vset.pattern.permute.xlu0 0
        %471 = vperm.xlu0 %470, %v452
        %v472 = vpop.permute.xlu0 %471
        %vm473 = vcmp.eq.s32.totalorder %v454, %v472
        %v474 = vsel %vm473, %v456, 0.0
        %v475 = vsel %vm457, %v474, 0.0
        %476 = vadd.xlane.f32.xlu0 %v475
        %v477 = vpop.xlane.xlu0 %476
        %v478 = vsub.f32 %v469, %v477
        %v479 = vmul.f32 %v478, %v448
        %vm480 = vcmask 7168
        %v481 = vsel %vm480, %v479, 0.0
        %482 = vadd.xlane.f32.xlu0 %v481
        %v483 = vpop.xlane.xlu0 %482
        %v484 = vrot.slane %v483, 4
        %v485 = vadd.f32 %v483, %v484
        %v486 = vrot.slane %v485, 2
        %v487 = vadd.f32 %v485, %v486
        %v488 = vrot.slane %v487, 1
        %v489 = vadd.f32 %v487, %v488
        %s490 = vtos %v489
        %v491 = vld [vmem:[%s355] sm:$0xff]
        %v492 = vsel %vm450, %v491, 0.0
        %v493 = vsel %vm457, %v492, -inf
        %494 = vmax.xlane.f32.xlu0 %v493
        %v495 = vpop.xlane.xlu0 %494
        %v496 = vsub.f32 %v492, %v495
        %v497 = vmul.f32 %v496, 1.442695
        %v498 = vpow.pop %v497
        %v499 = vsel %vm457, %v498, 0.0
        %500 = vadd.xlane.f32.xlu0 %v499
        %v501 = vpop.xlane.xlu0 %500
        %v502 = vlog2.pop %v501
        %v503 = vmul.f32 %v502, 0.6931472
        %v504 = vadd.f32 %v495, %v503
        %505 = vset.pattern.permute.xlu0 1
        %506 = vperm.xlu0 %505, %v452
        %v507 = vpop.permute.xlu0 %506
        %vm508 = vcmp.eq.s32.totalorder %v454, %v507
        %v509 = vsel %vm508, %v492, 0.0
        %v510 = vsel %vm457, %v509, 0.0
        %511 = vadd.xlane.f32.xlu0 %v510
        %v512 = vpop.xlane.xlu0 %511
        %v513 = vsub.f32 %v504, %v512
        %v514 = vmul.f32 %v513, %v448
        %v515 = vsel %vm480, %v514, 0.0
        %516 = vadd.xlane.f32.xlu0 %v515
        %v517 = vpop.xlane.xlu0 %516
        %v518 = vrot.slane %v517, 4
        %v519 = vadd.f32 %v517, %v518
        %v520 = vrot.slane %v519, 2
        %v521 = vadd.f32 %v519, %v520
        %v522 = vrot.slane %v521, 1
        %v523 = vadd.f32 %v521, %v522
        %s524 = vtos %v523
        %v525 = vld [vmem:[%s412] sm:$0xff]
        %v526 = vld [vmem:[%s337] sm:$0xff]
        %v527 = vsub.f32 %v525, %v526
        %v528 = vadd.f32 %v527, 1e-06
        %v529 = vsel %vm450, %v528, 0.0
        %v530 = vmul.f32 %v529, %v529
        %vm531 = vcmask 261120
        %v532 = vsel %vm531, %v530, 0.0
        %533 = vadd.xlane.f32.xlu0 %v532
        %v534 = vpop.xlane.xlu0 %533
        %v535 = vrsqrt.pop %v534
        %v536 = vmul.f32 %v534, %v535
        %vm537 = vcmp.eq.f32.partialorder %v534, inf
        %v538 = vsel %vm537, %v534, %v536
        %vm539 = vcmp.eq.f32.partialorder %v534, 0.0
        %v540 = vand.u32 %v534, 2147483648
        %v541 = vsel %vm539, %v540, %v538
        %v542 = vsub.f32 1.0, %v541
        %v543 = vmax.f32 %v542, 0.0
        %v544 = vsub.f32 1.0, %v451
        %v545 = vmul.f32 %v544, %v534
        %v546 = vmul.f32 %v543, %v543
        %v547 = vmul.f32 %v451, %v546
        %v548 = vadd.f32 %v545, %v547
        %v549 = vmul.f32 %v548, %v448
        %551 = vrot.lane.b32.xlu0 %v549, 126
        %v552 = vpop.permute.xlu0 %551
        %v554 = vsel %vm480, %v552, 0.0
        %555 = vadd.xlane.f32.xlu0 %v554
        %v556 = vpop.xlane.xlu0 %555
        %v557 = vrot.slane %v556, 4
        %v558 = vadd.f32 %v556, %v557
        %v559 = vrot.slane %v558, 2
        %v560 = vadd.f32 %v558, %v559
        %v561 = vrot.slane %v560, 1
        %v562 = vadd.f32 %v560, %v561
        %s563 = vtos %v562
        %vm564 = vcmp.eq.s32.totalorder %v454, 0
        %v565 = vstv %s563
        %v566 = vsel %vm564, %v565, 0.0
        %vm567 = vcmp.eq.s32.totalorder %v454, 1
        %v568 = vstv %s490
        %v569 = vsel %vm567, %v568, 0.0
        %v570 = vadd.f32 %v566, %v569
        %vm571 = vcmp.eq.s32.totalorder %v454, 2
        %v572 = vstv %s524
        %v573 = vsel %vm571, %v572, 0.0
        %v574 = vadd.f32 %v570, %v573
        %v575 = vld [vmem:[%s405] sm:$0xff]
        %v576 = vadd.f32 %v575, %v574
        %577 = vst [vmem:[%s405] sm:$0xff] %v576
        %s578 = sand.u32 %s205, 1
        %s579 = scalar_lea.sflag [#allocation4], %s578
        %s580 = sand.u32 %s205, 1
        %s581 = smul.addr %s580, 8
        %s582 = scalar_lea.vmem [#allocation8], %s581
        // Predicated region
        $region57: #{tpu_custom_call.1} parent=39 // pred_check
          %p583 = pneg %p215
        $region58: #{tpu_custom_call.1} parent=39 // pred_check_branch
          %585 = sbr.rel (%p583) target = $region60
        $region59: #{tpu_custom_call.1} parent=39 // pred_region
          %s587 = ssub.s32 128, 128
          %588 = vsyncadd %s579, %s587
          %s589 = smul.addr %s29, 128
          %s590 = scalar_lea.hbm %s5, %s589
          %s592 = sshll.u32 %s582, 4
          %s593 = int_to_ptr.vmem [resolvable:$true] %s592
          %595 = dma.vmem_to_hbm [thread:$0]  %s593, 128, %s590, %s579
        $region60: #{tpu_custom_call.1} parent=39 // pred_fallthru
          _
      $region40: #{tpu_custom_call.1} parent=5 // pred_fallthru
        _
      %p596 = scmp.le.s32.totalorder 2, %s20
      // Predicated region
      $region61: #{tpu_custom_call.1} parent=5 // pred_check
        %p597 = pneg %p596
      $region62: #{tpu_custom_call.1} parent=5 // pred_check_branch
        %599 = sbr.rel (%p597) target = $region64
      $region63: #{tpu_custom_call.1} parent=5 // pred_region
        %s600 = ssub.s32 %s20, 2
        // Predicated region
        $region65: #{tpu_custom_call.1} parent=63 // pred_check
          %p601 = pneg %p221
        $region66: #{tpu_custom_call.1} parent=63 // pred_check_branch
          %603 = sbr.rel (%p601) target = $region68
        $region67: #{tpu_custom_call.1} parent=63 // pred_region
          %s604 = sand.u32 %s206, 1
          %s605 = scalar_lea.sflag [#allocation4], %s604
          %s606 = sand.u32 %s206, 1
          %s607 = smul.addr %s606, 8
          %s608 = scalar_lea.vmem [#allocation8], %s607
          %609 = dma.done %s605, 128
        $region68: #{tpu_custom_call.1} parent=63 // pred_fallthru
          _
      $region64: #{tpu_custom_call.1} parent=5 // pred_fallthru
        _
    $region6: #{tpu_custom_call.1} parent=1 // loop_footer
      %s24 = sadd.s32 1, %s20
    $region7: #{tpu_custom_call.1} parent=1 // loop_footer_branch
      %19 = sbr.rel target = $region3
    $region8: #{tpu_custom_call.1} parent=1 // loop_exit
      _
    %610 = vsyncpa [#allocation3], 1
    %s611 = scalar_lea.sflag [#allocation3], 1
    %612 = vsyncpa %s611, 1
    %613 = vsyncpa [#allocation6], 1
    %s614 = scalar_lea.sflag [#allocation6], 1
    %615 = vsyncpa %s614, 1
    %616 = vsyncpa [#allocation4], 1
    %s617 = scalar_lea.sflag [#allocation4], 1
    %618 = vsyncpa %s617, 1

</llo_original>
